<compile_context>
chip_gen: v7x
topology: tpu7x:2x2x1
jax: 0.10.0
libtpu: 0.0.40
codegen_flags: <defaults>
</compile_context>

<pallas_src>
import functools
import math

import jax
import jax.numpy as jnp
from jax import lax
from jax.experimental import pallas as pl
from jax.experimental.pallas import tpu as pltpu

_IDX_SENTINEL = 2 ** 30  # larger than any real index; ties at init prefer real data


def _kmax_kernel(x_ref, vals_ref, idx_ref, *, k: int, tl: int):
    """x_ref: (TR, TL) tile.  vals_ref/idx_ref: (TR, k), VMEM-resident across the L axis."""
    l = pl.program_id(1)

    @pl.when(l == 0)
    def _init():
        vals_ref[...] = jnp.full(vals_ref.shape, -jnp.inf, vals_ref.dtype)
        idx_ref[...] = jnp.full(idx_ref.shape, _IDX_SENTINEL, jnp.int32)

    tile = x_ref[...].astype(jnp.float32)                                   # (TR, TL)
    tile_idx = lax.broadcasted_iota(jnp.int32, tile.shape, 1) + l * tl      # global indices

    run_vals = vals_ref[...].astype(jnp.float32)                            # (TR, k)
    run_idx = idx_ref[...]                                                  # (TR, k)

    neg_inf = jnp.float32(-jnp.inf)
    big = jnp.int32(_IDX_SENTINEL)

    work_t = tile
    work_r = run_vals
    for j in range(k):  # k is small and static -> fully unrolled
        # best remaining candidate in the current tile
        m_t = jnp.max(work_t, axis=1, keepdims=True)                                     # (TR,1)
        i_t = jnp.min(jnp.where(work_t == m_t, tile_idx, big), axis=1, keepdims=True)    # (TR,1)
        # best remaining candidate in the running top-k (from earlier tiles)
        m_r = jnp.max(work_r, axis=1, keepdims=True)
        i_r = jnp.min(jnp.where(work_r == m_r, run_idx, big), axis=1, keepdims=True)

        # prefer larger value; on ties prefer the lower global index
        take_r = (m_r > m_t) | ((m_r == m_t) & (i_r < i_t))                               # (TR,1)
        m = jnp.where(take_r, m_r, m_t)
        i = jnp.where(take_r, i_r, i_t)

        vals_ref[:, pl.ds(j, 1)] = m.astype(vals_ref.dtype)
        idx_ref[:, pl.ds(j, 1)] = i

        # remove the selected element from its source so round j+1 picks the next one
        work_t = jnp.where((~take_r) & (tile_idx == i), neg_inf, work_t)
        work_r = jnp.where(take_r & (run_idx == i), neg_inf, work_r)


def _round_up(a: int, b: int) -> int:
    return (a + b - 1) // b * b


def kmax_pooling(x: jax.Array, k: int, dim: int, *, tile_rows: int = 256,
                 tile_len: int = 512):
    """Equivalent of kmax_pooling(dim, k).forward(x): returns (values, indices)."""
    assert jnp.issubdtype(x.dtype, jnp.floating), "kernel supports floating inputs"
    ndim = x.ndim
    dim = dim % ndim
    moved = dim != ndim - 1
    xm = jnp.moveaxis(x, dim, -1) if moved else x      # no-op for the common dim=last case

    lead = xm.shape[:-1]
    L = xm.shape[-1]
    assert 0 < k <= L, "k must be in [1, size of the reduced dim]"
    R = math.prod(lead) if lead else 1
    x2 = xm.reshape(R, L)

    # Tile sizes: lane-dim tile of <=512 bounds the double-buffered VMEM footprint
    # (TR*TL*4B per buffer) well under every generation's scoped limit, incl. v7x.
    tl = min(tile_len, _round_up(L, 128))
    l_pad = _round_up(L, tl)
    tr = min(tile_rows, _round_up(R, 8))
    r_pad = _round_up(R, tr)

    if (r_pad, l_pad) != (R, L):
        # pad the reduced axis with -inf so padding never enters the top-k
        x2 = jnp.pad(x2, ((0, r_pad - R), (0, l_pad - L)),
                     constant_values=float("-inf"))

    kernel = functools.partial(_kmax_kernel, k=k, tl=tl)

    vals, idx = pl.pallas_call(
        kernel,
        out_shape=(jax.ShapeDtypeStruct((r_pad, k), x2.dtype),
                   jax.ShapeDtypeStruct((r_pad, k), jnp.int32)),
        grid_spec=pltpu.PrefetchScalarGridSpec(
            num_scalar_prefetch=0,
            grid=(r_pad // tr, l_pad // tl),
            in_specs=[pl.BlockSpec((tr, tl), lambda r, l: (r, l))],
            out_specs=[pl.BlockSpec((tr, k), lambda r, l: (r, 0)),
                       pl.BlockSpec((tr, k), lambda r, l: (r, 0))],
        ),
        compiler_params=pltpu.CompilerParams(
            dimension_semantics=("parallel", "arbitrary")),
    )(x2)

    vals = vals[:R].reshape(lead + (k,))
    idx = idx[:R].reshape(lead + (k,))
    if moved:
        vals = jnp.moveaxis(vals, -1, dim)
        idx = jnp.moveaxis(idx, -1, dim)
    return vals, idx


def _reference(x, k, dim):
    xm = jnp.moveaxis(x, dim, -1)
    v, i = jax.lax.top_k(xm, k)
    return jnp.moveaxis(v, -1, dim), jnp.moveaxis(i, -1, dim)


if __name__ == "__main__":
    key = jax.random.PRNGKey(0)
    # Small shapes consistent with the module's use on point features:
    # batch=2, channels=4, points=16, k=2, top-k over the points dim.
    N, C, L, K = 2, 4, 16, 2
    x = jax.random.normal(key, (N, C, L), dtype=jnp.float32)

    vals, idx = kmax_pooling(x, K, dim=2)
    vals, idx = jax.block_until_ready((vals, idx))

    ref_v, ref_i = _reference(x, K, dim=2)
    assert vals.shape == (N, C, K) and idx.shape == (N, C, K)
    assert jnp.allclose(vals, ref_v, atol=0.0, rtol=0.0), "value mismatch (dim=2)"
    assert jnp.array_equal(idx, ref_i.astype(jnp.int32)), "index mismatch (dim=2)"

    # Also exercise a non-last reduction dim (wrapper moveaxis path).
    vals1, idx1 = kmax_pooling(x, K, dim=1)
    ref_v1, ref_i1 = _reference(x, K, dim=1)
    assert jnp.allclose(vals1, ref_v1, atol=0.0, rtol=0.0), "value mismatch (dim=1)"
    assert jnp.array_equal(idx1, ref_i1.astype(jnp.int32)), "index mismatch (dim=1)"

    print("KERNEL_OK")
</pallas_src>

<mosaic_0001>
module attributes {stable_mosaic.version = 11 : i64} {
  func.func @_kmax_kernel(%arg0: i32, %arg1: i32, %arg2: memref<8x128xf32, #tpu.memory_space<vmem>>, %arg3: memref<8x2xf32, #tpu.memory_space<vmem>>, %arg4: memref<8x2xi32, #tpu.memory_space<vmem>>) attributes {dimension_semantics = [#tpu.dimension_semantics<parallel>, #tpu.dimension_semantics<arbitrary>], iteration_bounds = array<i64: 1, 1>, scalar_prefetch = 0 : i64, scratch_operands = 0 : i64, tpu.core_type = #tpu.core_type<tc>, window_params = [{transform_indices = @transform_0, window_bounds = array<i64: 8, 128>}, {transform_indices = @transform_1, window_bounds = array<i64: 8, 2>}, {transform_indices = @transform_2, window_bounds = array<i64: 8, 2>}]} {
    %c0_i32 = arith.constant 0 : i32
    %0 = arith.cmpi eq, %arg1, %c0_i32 : i32
    %1 = arith.extui %0 : i1 to i32
    %c0_i32_0 = arith.constant 0 : i32
    %2 = arith.cmpi ne, %1, %c0_i32_0 : i32
    scf.if %2 {
      %cst_26 = arith.constant 0xFF800000 : f32
      %73 = vector.broadcast %cst_26 : f32 to vector<8x2xf32>
      %c0_27 = arith.constant 0 : index
      %c0_28 = arith.constant 0 : index
      %74 = vector.load %arg3[%c0_27, %c0_28] : memref<8x2xf32, #tpu.memory_space<vmem>>, vector<8x2xf32>
      tpu.vector_store %arg3[%c0_27, %c0_28], %73 {strides = array<i32>} : memref<8x2xf32, #tpu.memory_space<vmem>>, vector<8x2xf32>,
      %c1073741824_i32_29 = arith.constant 1073741824 : i32
      %75 = vector.broadcast %c1073741824_i32_29 : i32 to vector<8x2xi32>
      %c0_30 = arith.constant 0 : index
      %c0_31 = arith.constant 0 : index
      %76 = vector.load %arg4[%c0_30, %c0_31] : memref<8x2xi32, #tpu.memory_space<vmem>>, vector<8x2xi32>
      tpu.vector_store %arg4[%c0_30, %c0_31], %75 {strides = array<i32>} : memref<8x2xi32, #tpu.memory_space<vmem>>, vector<8x2xi32>,
    } else {
    }
    %c0 = arith.constant 0 : index
    %c0_1 = arith.constant 0 : index
    %3 = vector.load %arg2[%c0, %c0_1] : memref<8x128xf32, #tpu.memory_space<vmem>>, vector<8x128xf32>
    %4 = tpu.iota {dimensions = array<i32: 1>} : vector<8x128xi32>
    %c128_i32 = arith.constant 128 : i32
    %5 = arith.muli %arg1, %c128_i32 : i32
    %6 = vector.broadcast %5 : i32 to vector<8x128xi32>
    %7 = arith.addi %4, %6 : vector<8x128xi32>
    %c0_2 = arith.constant 0 : index
    %c0_3 = arith.constant 0 : index
    %8 = vector.load %arg3[%c0_2, %c0_3] : memref<8x2xf32, #tpu.memory_space<vmem>>, vector<8x2xf32>
    %c0_4 = arith.constant 0 : index
    %c0_5 = arith.constant 0 : index
    %9 = vector.load %arg4[%c0_4, %c0_5] : memref<8x2xi32, #tpu.memory_space<vmem>>, vector<8x2xi32>
    %cst = arith.constant dense<0xFF800000> : vector<8xf32>
    %10 = vector.multi_reduction <maximumf>, %3, %cst [1] : vector<8x128xf32> to vector<8xf32>
    %11 = vector.shape_cast %10 : vector<8xf32> to vector<8x1xf32>
    %12 = vector.broadcast %11 : vector<8x1xf32> to vector<8x128xf32>
    %13 = arith.cmpf oeq, %3, %12 : vector<8x128xf32>
    %c1073741824_i32 = arith.constant 1073741824 : i32
    %14 = vector.broadcast %c1073741824_i32 : i32 to vector<8x128xi32>
    %15 = arith.select %13, %7, %14 : vector<8x128xi1>, vector<8x128xi32>
    %cst_6 = arith.constant dense<2147483647> : vector<8xi32>
    %16 = vector.multi_reduction <minsi>, %15, %cst_6 [1] : vector<8x128xi32> to vector<8xi32>
    %17 = vector.shape_cast %16 : vector<8xi32> to vector<8x1xi32>
    %cst_7 = arith.constant dense<0xFF800000> : vector<8xf32>
    %18 = vector.multi_reduction <maximumf>, %8, %cst_7 [1] : vector<8x2xf32> to vector<8xf32>
    %19 = vector.shape_cast %18 : vector<8xf32> to vector<8x1xf32>
    %20 = vector.broadcast %19 : vector<8x1xf32> to vector<8x2xf32>
    %21 = arith.cmpf oeq, %8, %20 : vector<8x2xf32>
    %c1073741824_i32_8 = arith.constant 1073741824 : i32
    %22 = vector.broadcast %c1073741824_i32_8 : i32 to vector<8x2xi32>
    %23 = arith.select %21, %9, %22 : vector<8x2xi1>, vector<8x2xi32>
    %cst_9 = arith.constant dense<2147483647> : vector<8xi32>
    %24 = vector.multi_reduction <minsi>, %23, %cst_9 [1] : vector<8x2xi32> to vector<8xi32>
    %25 = vector.shape_cast %24 : vector<8xi32> to vector<8x1xi32>
    %26 = arith.cmpf ogt, %19, %11 : vector<8x1xf32>
    %27 = arith.cmpf oeq, %19, %11 : vector<8x1xf32>
    %28 = arith.cmpi slt, %25, %17 : vector<8x1xi32>
    %29 = arith.andi %27, %28 : vector<8x1xi1>
    %30 = arith.ori %26, %29 : vector<8x1xi1>
    %31 = arith.select %30, %19, %11 : vector<8x1xi1>, vector<8x1xf32>
    %32 = arith.select %30, %25, %17 : vector<8x1xi1>, vector<8x1xi32>
    %c0_10 = arith.constant 0 : index
    %c0_11 = arith.constant 0 : index
    %33 = vector.load %arg3[%c0_10, %c0_11] : memref<8x2xf32, #tpu.memory_space<vmem>>, vector<8x1xf32>
    tpu.vector_store %arg3[%c0_10, %c0_11], %31 {strides = array<i32>} : memref<8x2xf32, #tpu.memory_space<vmem>>, vector<8x1xf32>,
    %c0_12 = arith.constant 0 : index
    %c0_13 = arith.constant 0 : index
    %34 = vector.load %arg4[%c0_12, %c0_13] : memref<8x2xi32, #tpu.memory_space<vmem>>, vector<8x1xi32>
    tpu.vector_store %arg4[%c0_12, %c0_13], %32 {strides = array<i32>} : memref<8x2xi32, #tpu.memory_space<vmem>>, vector<8x1xi32>,
    %cst_14 = arith.constant dense<true> : vector<8x1xi1>
    %35 = arith.xori %30, %cst_14 : vector<8x1xi1>
    %36 = vector.broadcast %32 : vector<8x1xi32> to vector<8x128xi32>
    %37 = arith.cmpi eq, %7, %36 : vector<8x128xi32>
    %38 = vector.broadcast %35 : vector<8x1xi1> to vector<8x128xi1>
    %39 = arith.andi %38, %37 : vector<8x128xi1>
    %cst_15 = arith.constant 0xFF800000 : f32
    %40 = vector.broadcast %cst_15 : f32 to vector<8x128xf32>
    %41 = arith.select %39, %40, %3 : vector<8x128xi1>, vector<8x128xf32>
    %42 = vector.broadcast %32 : vector<8x1xi32> to vector<8x2xi32>
    %43 = arith.cmpi eq, %9, %42 : vector<8x2xi32>
    %44 = vector.broadcast %30 : vector<8x1xi1> to vector<8x2xi1>
    %45 = arith.andi %44, %43 : vector<8x2xi1>
    %cst_16 = arith.constant 0xFF800000 : f32
    %46 = vector.broadcast %cst_16 : f32 to vector<8x2xf32>
    %47 = arith.select %45, %46, %8 : vector<8x2xi1>, vector<8x2xf32>
    %cst_17 = arith.constant dense<0xFF800000> : vector<8xf32>
    %48 = vector.multi_reduction <maximumf>, %41, %cst_17 [1] : vector<8x128xf32> to vector<8xf32>
    %49 = vector.shape_cast %48 : vector<8xf32> to vector<8x1xf32>
    %50 = vector.broadcast %49 : vector<8x1xf32> to vector<8x128xf32>
    %51 = arith.cmpf oeq, %41, %50 : vector<8x128xf32>
    %c1073741824_i32_18 = arith.constant 1073741824 : i32
    %52 = vector.broadcast %c1073741824_i32_18 : i32 to vector<8x128xi32>
    %53 = arith.select %51, %7, %52 : vector<8x128xi1>, vector<8x128xi32>
    %cst_19 = arith.constant dense<2147483647> : vector<8xi32>
    %54 = vector.multi_reduction <minsi>, %53, %cst_19 [1] : vector<8x128xi32> to vector<8xi32>
    %55 = vector.shape_cast %54 : vector<8xi32> to vector<8x1xi32>
    %cst_20 = arith.constant dense<0xFF800000> : vector<8xf32>
    %56 = vector.multi_reduction <maximumf>, %47, %cst_20 [1] : vector<8x2xf32> to vector<8xf32>
    %57 = vector.shape_cast %56 : vector<8xf32> to vector<8x1xf32>
    %58 = vector.broadcast %57 : vector<8x1xf32> to vector<8x2xf32>
    %59 = arith.cmpf oeq, %47, %58 : vector<8x2xf32>
    %c1073741824_i32_21 = arith.constant 1073741824 : i32
    %60 = vector.broadcast %c1073741824_i32_21 : i32 to vector<8x2xi32>
    %61 = arith.select %59, %9, %60 : vector<8x2xi1>, vector<8x2xi32>
    %cst_22 = arith.constant dense<2147483647> : vector<8xi32>
    %62 = vector.multi_reduction <minsi>, %61, %cst_22 [1] : vector<8x2xi32> to vector<8xi32>
    %63 = vector.shape_cast %62 : vector<8xi32> to vector<8x1xi32>
    %64 = arith.cmpf ogt, %57, %49 : vector<8x1xf32>
    %65 = arith.cmpf oeq, %57, %49 : vector<8x1xf32>
    %66 = arith.cmpi slt, %63, %55 : vector<8x1xi32>
    %67 = arith.andi %65, %66 : vector<8x1xi1>
    %68 = arith.ori %64, %67 : vector<8x1xi1>
    %69 = arith.select %68, %57, %49 : vector<8x1xi1>, vector<8x1xf32>
    %70 = arith.select %68, %63, %55 : vector<8x1xi1>, vector<8x1xi32>
    %c0_23 = arith.constant 0 : index
    %c1 = arith.constant 1 : index
    %71 = vector.load %arg3[%c0_23, %c1] : memref<8x2xf32, #tpu.memory_space<vmem>>, vector<8x1xf32>
    tpu.vector_store %arg3[%c0_23, %c1], %69 {strides = array<i32>} : memref<8x2xf32, #tpu.memory_space<vmem>>, vector<8x1xf32>,
    %c0_24 = arith.constant 0 : index
    %c1_25 = arith.constant 1 : index
    %72 = vector.load %arg4[%c0_24, %c1_25] : memref<8x2xi32, #tpu.memory_space<vmem>>, vector<8x1xi32>
    tpu.vector_store %arg4[%c0_24, %c1_25], %70 {strides = array<i32>} : memref<8x2xi32, #tpu.memory_space<vmem>>, vector<8x1xi32>,
    return
  }
  func.func @transform_0(%arg0: i32, %arg1: i32) -> (i32, i32) {
    %c0_i32 = arith.constant 0 : i32
    return %arg0, %arg1 : i32, i32
  }
  func.func @transform_1(%arg0: i32, %arg1: i32) -> (i32, i32) {
    %c0_i32 = arith.constant 0 : i32
    %c0_i32_0 = arith.constant 0 : i32
    return %arg0, %c0_i32 : i32, i32
  }
  func.func @transform_2(%arg0: i32, %arg1: i32) -> (i32, i32) {
    %c0_i32 = arith.constant 0 : i32
    %c0_i32_0 = arith.constant 0 : i32
    return %arg0, %c0_i32 : i32, i32
  }
}

</mosaic_0001>

<llo_original>
// kernel: tpu_custom_call.1
$region0: #{tpu_custom_call.1}
  #allocation0 [shape = 'u32[]', space=smem, size = 0x4, offset = 0x4, fixed_abs, tag = 'smem constant byte address 0x4 - core index']
  #allocation1 [shape = 'u32[144,128]{1,0:T(1,128)}', space=vmem, size = 0x12000, scoped, tag = 'internal scratch']
  %s0 = inlined_call_operand.hbm [shape: f32[8,128], index: 0, kind: input, shape index: {}]
  %s1 = inlined_call_operand.vmem [shape: f32[8,2], index: 1, kind: output, shape index: {0}]
  %s2 = inlined_call_operand.vmem [shape: s32[8,2], index: 2, kind: output, shape index: {1}]
  %3 = xla_tuple %s1, %s2
  %s4 = sld [smem:[#allocation0]]
  $region30: #{tpu_custom_call.1} parent=0
    _
  %s6 = ssub.s32 1, %s4
  %s7 = scalar_select 0, %s6, %s4
  $region1: #{tpu_custom_call.1} parent=0
    #allocation2 [shape = 'u8[4096]{0}', space=vmem, size = 0x1000, scoped, tag = 'input window, operand 0, single buffered']
    #allocation3 [shape = 's32[1]{0}', space=sflag, size = 0x4, scoped, tag = 'scoped memory for tpu_custom_call.1']
    %8 = vsyncpa [#allocation3], 0
    // Predicated region
    $region2: #{tpu_custom_call.1} parent=1 // pred_check
      _
    $region3: #{tpu_custom_call.1} parent=1 // pred_check_branch
      %10 = sbr.rel (0) target = $region5
    $region4: #{tpu_custom_call.1} parent=1 // pred_region
      %s12 = ssub.s32 128, 128
      %13 = vsyncadd [#allocation3], %s12
      %s15 = sshll.u32 [#allocation2], 4
      %s16 = int_to_ptr.vmem [resolvable:$true] %s15
      %18 = dma.hbm_to_vmem [thread:$0]  %s0, 128, %s16, [#allocation3]
    $region5: #{tpu_custom_call.1} parent=1 // pred_fallthru
      _
    // Predicated region
    $region6: #{tpu_custom_call.1} parent=1 // pred_check
      _
    $region7: #{tpu_custom_call.1} parent=1 // pred_check_branch
      %20 = sbr.rel (0) target = $region9
    $region8: #{tpu_custom_call.1} parent=1 // pred_region
      %21 = dma.done [#allocation3], 128
    $region9: #{tpu_custom_call.1} parent=1 // pred_fallthru
      _
    %p22 = scmp.eq.s32.totalorder 0, 0
    // Predicated region
    $region10: #{tpu_custom_call.1} parent=1 // pred_check
      %p23 = pneg %p22
    $region11: #{tpu_custom_call.1} parent=1 // pred_check_branch
      %25 = sbr.rel (%p23) target = $region13
    $region12: #{tpu_custom_call.1} parent=1 // pred_region
      %vm26 = vcmask 15360
      %27 = vst.msk [vmem:[%s1] sm:$0xff] %vm26, -inf
      %28 = vst.msk [vmem:[%s2] sm:$0xff] %vm26, 1073741824
    $region13: #{tpu_custom_call.1} parent=1 // pred_fallthru
      _
    %v29 = vld [vmem:[#allocation2] sm:$0xff]
    %v30 = vlaneseq
    %v31 = vand.u32 %v30, 127
    %s32 = smul.u32 0, 128
    %v33 = vstv %s32
    %v34 = vadd.s32 %v31, %v33
    %v35 = vld [vmem:[%s1] sm:$0xff]
    %v36 = vld [vmem:[%s2] sm:$0xff]
    %37 = vmax.xlane.f32.xlu0 %v29
    %v38 = vpop.xlane.xlu0 %37
    %vm39 = vcmp.eq.f32.partialorder %v29, %v38
    %v40 = vsel %vm39, %v34, 1073741824
    %v41 = vand.u32 %v40, 65535
    %v42 = vshra.s32 %v40, 16
    %v43 = vcvt.s32.f32 %v41
    %v44 = vcvt.s32.f32 %v42
    %45 = vmin.xlane.f32.xlu0 %v44
    %v46 = vpop.xlane.xlu0 %45
    %vm47 = vcmp.eq.f32.partialorder %v44, %v46
    %v48 = vsel %vm47, %v43, inf
    %49 = vmin.xlane.f32.xlu0 %v48
    %v50 = vpop.xlane.xlu0 %49
    %v51 = vcvt.f32.s32 %v50
    %v52 = vcvt.f32.s32 %v46
    %v53 = vshll.u32 %v52, 16
    %v54 = vadd.s32 %v53, %v51
    %vm55 = vcmask 15360
    %v56 = vsel %vm55, %v35, -inf
    %57 = vmax.xlane.f32.xlu0 %v56
    %v58 = vpop.xlane.xlu0 %57
    %vm59 = vcmp.eq.f32.partialorder %v35, %v58
    %v60 = vsel %vm59, %v36, 1073741824
    %v61 = vsel %vm55, %v60, 2147483647
    %v62 = vand.u32 %v61, 65535
    %v63 = vshra.s32 %v61, 16
    %v64 = vcvt.s32.f32 %v62
    %v65 = vcvt.s32.f32 %v63
    %66 = vmin.xlane.f32.xlu0 %v65
    %v67 = vpop.xlane.xlu0 %66
    %vm68 = vcmp.eq.f32.partialorder %v65, %v67
    %v69 = vsel %vm68, %v64, inf
    %70 = vmin.xlane.f32.xlu0 %v69
    %v71 = vpop.xlane.xlu0 %70
    %v72 = vcvt.f32.s32 %v71
    %v73 = vcvt.f32.s32 %v67
    %v74 = vshll.u32 %v73, 16
    %v75 = vadd.s32 %v74, %v72
    %vm76 = vcmp.gt.f32.partialorder %v58, %v38
    %vm77 = vcmp.eq.f32.partialorder %v58, %v38
    %vm78 = vcmp.lt.s32.totalorder %v75, %v54
    %vm79 = vmand %vm77, %vm78
    %vm80 = vmor %vm76, %vm79
    %v81 = vsel %vm80, %v58, %v38
    %v82 = vsel %vm80, %v75, %v54
    %vm83 = vcmask 7168
    %84 = vst.msk [vmem:[%s1] sm:$0xff] %vm83, %v81
    %85 = vst.msk [vmem:[%s2] sm:$0xff] %vm83, %v82
    %vm86 = vmxor %vm80, 1
    %vm87 = vcmp.eq.s32.totalorder %v34, %v82
    %v88 = vsel %vm86, 1, 0
    %vm89 = vcmp.eq.s32.totalorder %v88, 1
    %vm90 = vmand %vm89, %vm87
    %v91 = vsel %vm90, -inf, %v29
    %vm92 = vcmp.eq.s32.totalorder %v36, %v82
    %v93 = vsel %vm80, 1, 0
    %vm94 = vcmp.eq.s32.totalorder %v93, 1
    %vm95 = vmand %vm94, %vm92
    %v96 = vsel %vm95, -inf, %v35
    %97 = vmax.xlane.f32.xlu0 %v91
    %v98 = vpop.xlane.xlu0 %97
    %vm99 = vcmp.eq.f32.partialorder %v91, %v98
    %v100 = vsel %vm99, %v34, 1073741824
    %v101 = vand.u32 %v100, 65535
    %v102 = vshra.s32 %v100, 16
    %v103 = vcvt.s32.f32 %v101
    %v104 = vcvt.s32.f32 %v102
    %105 = vmin.xlane.f32.xlu0 %v104
    %v106 = vpop.xlane.xlu0 %105
    %vm107 = vcmp.eq.f32.partialorder %v104, %v106
    %v108 = vsel %vm107, %v103, inf
    %109 = vmin.xlane.f32.xlu0 %v108
    %v110 = vpop.xlane.xlu0 %109
    %v111 = vcvt.f32.s32 %v110
    %v112 = vcvt.f32.s32 %v106
    %v113 = vshll.u32 %v112, 16
    %v114 = vadd.s32 %v113, %v111
    %v115 = vsel %vm55, %v96, -inf
    %116 = vmax.xlane.f32.xlu0 %v115
    %v117 = vpop.xlane.xlu0 %116
    %vm118 = vcmp.eq.f32.partialorder %v96, %v117
    %v119 = vsel %vm118, %v36, 1073741824
    %v120 = vsel %vm55, %v119, 2147483647
    %v121 = vand.u32 %v120, 65535
    %v122 = vshra.s32 %v120, 16
    %v123 = vcvt.s32.f32 %v121
    %v124 = vcvt.s32.f32 %v122
    %125 = vmin.xlane.f32.xlu0 %v124
    %v126 = vpop.xlane.xlu0 %125
    %vm127 = vcmp.eq.f32.partialorder %v124, %v126
    %v128 = vsel %vm127, %v123, inf
    %129 = vmin.xlane.f32.xlu0 %v128
    %v130 = vpop.xlane.xlu0 %129
    %v131 = vcvt.f32.s32 %v130
    %v132 = vcvt.f32.s32 %v126
    %v133 = vshll.u32 %v132, 16
    %v134 = vadd.s32 %v133, %v131
    %vm135 = vcmp.gt.f32.partialorder %v117, %v98
    %vm136 = vcmp.eq.f32.partialorder %v117, %v98
    %vm137 = vcmp.lt.s32.totalorder %v134, %v114
    %vm138 = vmand %vm136, %vm137
    %vm139 = vmor %vm135, %vm138
    %v140 = vsel %vm139, %v117, %v98
    %v141 = vsel %vm139, %v134, %v114
    %vm142 = vcmask 15368
    %143 = vst.msk [vmem:[%s1] sm:$0xff] %vm142, %v140
    %144 = vst.msk [vmem:[%s2] sm:$0xff] %vm142, %v141
    // Predicated region
    $region14: #{tpu_custom_call.1} parent=1 // pred_check
      _
    $region15: #{tpu_custom_call.1} parent=1 // pred_check_branch
      %146 = sbr.rel (0) target = $region17
    $region16: #{tpu_custom_call.1} parent=1 // pred_region
      _
    $region17: #{tpu_custom_call.1} parent=1 // pred_fallthru
      _
    // Predicated region
    $region18: #{tpu_custom_call.1} parent=1 // pred_check
      _
    $region19: #{tpu_custom_call.1} parent=1 // pred_check_branch
      %148 = sbr.rel (0) target = $region21
    $region20: #{tpu_custom_call.1} parent=1 // pred_region
      _
    $region21: #{tpu_custom_call.1} parent=1 // pred_fallthru
      _
    // Predicated region
    $region22: #{tpu_custom_call.1} parent=1 // pred_check
      _
    $region23: #{tpu_custom_call.1} parent=1 // pred_check_branch
      %150 = sbr.rel (0) target = $region25
    $region24: #{tpu_custom_call.1} parent=1 // pred_region
      _
    $region25: #{tpu_custom_call.1} parent=1 // pred_fallthru
      _
    // Predicated region
    $region26: #{tpu_custom_call.1} parent=1 // pred_check
      _
    $region27: #{tpu_custom_call.1} parent=1 // pred_check_branch
      %152 = sbr.rel (0) target = $region29
    $region28: #{tpu_custom_call.1} parent=1 // pred_region
      _
    $region29: #{tpu_custom_call.1} parent=1 // pred_fallthru
      _
    %153 = vsyncpa [#allocation3], 1

</llo_original>
